<compile_context>
chip_gen: v6e
topology: v6e:2x2x1
jax: 0.10.0
libtpu: 0.0.40
codegen_flags: <defaults>
</compile_context>

<pallas_src>
import jax
import jax.numpy as jnp
from jax.experimental import pallas as pl
from jax.experimental.pallas import tpu as pltpu


def _round_up(x, m):
    return (x + m - 1) // m * m


def _mlp_kernel(x_ref, w1_ref, b1_ref, w2_ref, b2_ref, w3_ref, b3_ref, o_ref):
    # One batch tile: three MXU matmuls (bf16 in, f32 accumulate) + ReLUs, fully fused.
    cd = w1_ref.dtype
    x = x_ref[...].astype(cd)  # in-kernel f32 -> bf16 cast; no wrapper HBM round-trip.
    h1 = jnp.dot(x, w1_ref[...], preferred_element_type=jnp.float32) + b1_ref[...]
    h1 = jnp.maximum(h1, 0.0).astype(cd)
    h2 = jnp.dot(h1, w2_ref[...], preferred_element_type=jnp.float32) + b2_ref[...]
    h2 = jnp.maximum(h2, 0.0).astype(cd)
    h3 = jnp.dot(h2, w3_ref[...], preferred_element_type=jnp.float32) + b3_ref[...]
    o_ref[...] = h3.astype(o_ref.dtype)


def three_layer_net(x, params, *, tile_m=1024, compute_dtype=jnp.bfloat16):
    """x: (B, ...) -> flattened to (B, input_size) like torch.flatten(x, 1).

    Weights are stored transposed vs PyTorch, i.e. (in_features, out_features), so the
    kernel computes y = x @ W + b directly on the MXU.
    """
    b = x.shape[0]
    x2d = x.reshape(b, -1)
    w1, b1, w2, b2, w3, b3 = params
    k_in, hidden = w1.shape
    out = w3.shape[1]

    kp = _round_up(k_in, 128)    # contraction dim, lane-padded
    hp = _round_up(hidden, 128)  # hidden dim, lane-padded (full-width MXU columns)

    # Batch tile: multiple of 8 sublanes, <= tile_m; batch padded only when misaligned.
    tm = _round_up(min(tile_m, _round_up(b, 8)), 8)
    bp = _round_up(b, tm)

    def pad2(a, rows, cols):
        if a.shape == (rows, cols):
            return a
        return jnp.pad(a, ((0, rows - a.shape[0]), (0, cols - a.shape[1])))

    # Activations keep their original dtype (cast happens inside the kernel).
    x_in = pad2(x2d, bp, kp)

    # Tiny resident weights/biases: zero-pad + cast once in the wrapper (negligible traffic).
    # Output dim of w3/b3 is deliberately NOT padded -> narrow (B, out) writeback.
    w1_p = pad2(w1, kp, hp).astype(compute_dtype)
    w2_p = pad2(w2, hp, hp).astype(compute_dtype)
    w3_p = pad2(w3, hp, out).astype(compute_dtype)
    b1_p = pad2(b1, 1, hp).astype(jnp.float32)
    b2_p = pad2(b2, 1, hp).astype(jnp.float32)
    b3_p = b3.astype(jnp.float32)

    grid = (bp // tm,)

    def resident(arr):
        # Whole (tiny) array as one block, same block every grid step -> VMEM resident.
        return pl.BlockSpec(arr.shape, lambda i: (0, 0))

    x_item = jnp.dtype(x_in.dtype).itemsize
    w_item = jnp.dtype(compute_dtype).itemsize

    # VMEM budget: double-buffered streamed tiles + resident params + f32/bf16 temporaries.
    est = (2 * tm * kp * x_item
           + 2 * tm * out * 4
           + 2 * (w1_p.size + w2_p.size + w3_p.size) * w_item
           + 2 * (b1_p.size + b2_p.size + b3_p.size) * 4
           + 2 * tm * hp * (4 + w_item))
    # Floor at the v6e/v7x scoped default, leave headroom under v7x's 64 MiB physical VMEM.
    vmem_limit = int(min(max(2 * est + (4 << 20), 32 << 20), 60 << 20))

    cost = pl.CostEstimate(
        flops=2 * bp * (kp * hp + hp * hp + hp * out),
        transcendentals=0,
        bytes_accessed=(x_in.size * x_item
                        + (w1_p.size + w2_p.size + w3_p.size) * w_item
                        + (b1_p.size + b2_p.size + b3_p.size) * 4
                        + bp * out * 4),
    )

    out_arr = pl.pallas_call(
        _mlp_kernel,
        out_shape=jax.ShapeDtypeStruct((bp, out), jnp.float32),
        grid=grid,
        in_specs=[
            pl.BlockSpec((tm, kp), lambda i: (i, 0)),   # streamed activation tile (f32)
            resident(w1_p), resident(b1_p),
            resident(w2_p), resident(b2_p),
            resident(w3_p), resident(b3_p),
        ],
        out_specs=pl.BlockSpec((tm, out), lambda i: (i, 0)),
        compiler_params=pltpu.CompilerParams(
            dimension_semantics=("parallel",),
            vmem_limit_bytes=vmem_limit,
        ),
        cost_estimate=cost,
    )(x_in, w1_p, b1_p, w2_p, b2_p, w3_p, b3_p)

    if bp != b:
        out_arr = out_arr[:b]
    return out_arr


def init_params(key, input_size, hidden_size, output_size):
    """Deterministic init mimicking nn.Linear default (uniform +/- 1/sqrt(fan_in))."""
    ks = jax.random.split(key, 6)

    def linear(kw, kb, fan_in, fan_out):
        bound = 1.0 / jnp.sqrt(fan_in)
        w = jax.random.uniform(kw, (fan_in, fan_out), jnp.float32, -bound, bound)
        b = jax.random.uniform(kb, (1, fan_out), jnp.float32, -bound, bound)
        return w, b

    w1, b1 = linear(ks[0], ks[1], input_size, hidden_size)
    w2, b2 = linear(ks[2], ks[3], hidden_size, hidden_size)
    w3, b3 = linear(ks[4], ks[5], hidden_size, output_size)
    return (w1, b1, w2, b2, w3, b3)


if __name__ == "__main__":
    key = jax.random.PRNGKey(0)
    k_x, k_p = jax.random.split(key)

    # Small shapes: batch=2, NCHW input (2, 4, 16, 16) -> input_size = 1024
    batch, C, H, W = 2, 4, 16, 16
    input_size = C * H * W
    hidden_size = 32
    output_size = 8

    x = jax.random.normal(k_x, (batch, C, H, W), dtype=jnp.float32)
    params = init_params(k_p, input_size, hidden_size, output_size)

    out = three_layer_net(x, params)
    out = jax.block_until_ready(out)
    assert out.shape == (batch, output_size)

    # Reference 1: same bf16-input / f32-accumulate math as the kernel (tight check).
    w1, b1, w2, b2, w3, b3 = params
    cd = jnp.bfloat16
    xr = x.reshape(batch, -1).astype(cd)
    r = jnp.maximum(jnp.dot(xr, w1.astype(cd), preferred_element_type=jnp.float32) + b1, 0.0)
    r = jnp.maximum(jnp.dot(r.astype(cd), w2.astype(cd), preferred_element_type=jnp.float32) + b2, 0.0)
    ref_bf16 = jnp.dot(r.astype(cd), w3.astype(cd), preferred_element_type=jnp.float32) + b3
    assert jnp.allclose(out, ref_bf16, atol=2e-3, rtol=2e-3)

    # Reference 2: full-fp32 forward (loose check, bounds the bf16 quantization error).
    xf = x.reshape(batch, -1)
    rf = jnp.maximum(xf @ w1 + b1, 0.0)
    rf = jnp.maximum(rf @ w2 + b2, 0.0)
    ref_f32 = rf @ w3 + b3
    assert jnp.allclose(out, ref_f32, atol=5e-2, rtol=5e-2)

    print("KERNEL_OK")
</pallas_src>

<mosaic_0001>
module attributes {stable_mosaic.version = 11 : i64} {
  func.func @_mlp_kernel(%arg0: i32, %arg1: memref<8x1024xf32, #tpu.memory_space<vmem>>, %arg2: memref<1024x128xbf16, #tpu.memory_space<vmem>>, %arg3: memref<1x128xf32, #tpu.memory_space<vmem>>, %arg4: memref<128x128xbf16, #tpu.memory_space<vmem>>, %arg5: memref<1x128xf32, #tpu.memory_space<vmem>>, %arg6: memref<128x8xbf16, #tpu.memory_space<vmem>>, %arg7: memref<1x8xf32, #tpu.memory_space<vmem>>, %arg8: memref<8x8xf32, #tpu.memory_space<vmem>>) attributes {dimension_semantics = [#tpu.dimension_semantics<parallel>], iteration_bounds = array<i64: 1>, scalar_prefetch = 0 : i64, scratch_operands = 0 : i64, tpu.core_type = #tpu.core_type<tc>, window_params = [{transform_indices = @transform_0, window_bounds = array<i64: 8, 1024>}, {pipeline_mode = #tpu.pipeline_mode<synchronous>, transform_indices = @transform_1, window_bounds = array<i64: 1024, 128>}, {pipeline_mode = #tpu.pipeline_mode<synchronous>, transform_indices = @transform_2, window_bounds = array<i64: 1, 128>}, {pipeline_mode = #tpu.pipeline_mode<synchronous>, transform_indices = @transform_3, window_bounds = array<i64: 128, 128>}, {pipeline_mode = #tpu.pipeline_mode<synchronous>, transform_indices = @transform_4, window_bounds = array<i64: 1, 128>}, {pipeline_mode = #tpu.pipeline_mode<synchronous>, transform_indices = @transform_5, window_bounds = array<i64: 128, 8>}, {pipeline_mode = #tpu.pipeline_mode<synchronous>, transform_indices = @transform_6, window_bounds = array<i64: 1, 8>}, {transform_indices = @transform_7, window_bounds = array<i64: 8, 8>}]} {
    %c0 = arith.constant 0 : index
    %c0_0 = arith.constant 0 : index
    %0 = vector.load %arg1[%c0, %c0_0] : memref<8x1024xf32, #tpu.memory_space<vmem>>, vector<8x1024xf32>
    %1 = arith.truncf %0 : vector<8x1024xf32> to vector<8x1024xbf16>
    %c0_1 = arith.constant 0 : index
    %c0_2 = arith.constant 0 : index
    %2 = vector.load %arg2[%c0_1, %c0_2] : memref<1024x128xbf16, #tpu.memory_space<vmem>>, vector<1024x128xbf16>
    %cst = arith.constant dense<0.000000e+00> : vector<8x128xf32>
    %3 = tpu.matmul %1, %2, %cst {dimension_numbers = #tpu.dot_dimension_numbers<[1], [0], [0], [1], [0, 0, 1, 1], [], []>} : vector<8x1024xbf16>, vector<1024x128xbf16>, vector<8x128xf32> -> vector<8x128xf32>
    %c0_3 = arith.constant 0 : index
    %c0_4 = arith.constant 0 : index
    %4 = vector.load %arg3[%c0_3, %c0_4] : memref<1x128xf32, #tpu.memory_space<vmem>>, vector<1x128xf32>
    %5 = vector.broadcast %4 : vector<1x128xf32> to vector<8x128xf32>
    %6 = arith.addf %3, %5 : vector<8x128xf32>
    %cst_5 = arith.constant 0.000000e+00 : f32
    %7 = vector.broadcast %cst_5 : f32 to vector<8x128xf32>
    %8 = arith.maximumf %6, %7 : vector<8x128xf32>
    %9 = arith.truncf %8 : vector<8x128xf32> to vector<8x128xbf16>
    %c0_6 = arith.constant 0 : index
    %c0_7 = arith.constant 0 : index
    %10 = vector.load %arg4[%c0_6, %c0_7] : memref<128x128xbf16, #tpu.memory_space<vmem>>, vector<128x128xbf16>
    %cst_8 = arith.constant dense<0.000000e+00> : vector<8x128xf32>
    %11 = tpu.matmul %9, %10, %cst_8 {dimension_numbers = #tpu.dot_dimension_numbers<[1], [0], [0], [1], [0, 0, 1, 1], [], []>} : vector<8x128xbf16>, vector<128x128xbf16>, vector<8x128xf32> -> vector<8x128xf32>
    %c0_9 = arith.constant 0 : index
    %c0_10 = arith.constant 0 : index
    %12 = vector.load %arg5[%c0_9, %c0_10] : memref<1x128xf32, #tpu.memory_space<vmem>>, vector<1x128xf32>
    %13 = vector.broadcast %12 : vector<1x128xf32> to vector<8x128xf32>
    %14 = arith.addf %11, %13 : vector<8x128xf32>
    %cst_11 = arith.constant 0.000000e+00 : f32
    %15 = vector.broadcast %cst_11 : f32 to vector<8x128xf32>
    %16 = arith.maximumf %14, %15 : vector<8x128xf32>
    %17 = arith.truncf %16 : vector<8x128xf32> to vector<8x128xbf16>
    %c0_12 = arith.constant 0 : index
    %c0_13 = arith.constant 0 : index
    %18 = vector.load %arg6[%c0_12, %c0_13] : memref<128x8xbf16, #tpu.memory_space<vmem>>, vector<128x8xbf16>
    %cst_14 = arith.constant dense<0.000000e+00> : vector<8x8xf32>
    %19 = tpu.matmul %17, %18, %cst_14 {dimension_numbers = #tpu.dot_dimension_numbers<[1], [0], [0], [1], [0, 0, 1, 1], [], []>} : vector<8x128xbf16>, vector<128x8xbf16>, vector<8x8xf32> -> vector<8x8xf32>
    %c0_15 = arith.constant 0 : index
    %c0_16 = arith.constant 0 : index
    %20 = vector.load %arg7[%c0_15, %c0_16] : memref<1x8xf32, #tpu.memory_space<vmem>>, vector<1x8xf32>
    %21 = vector.broadcast %20 : vector<1x8xf32> to vector<8x8xf32>
    %22 = arith.addf %19, %21 : vector<8x8xf32>
    %c0_17 = arith.constant 0 : index
    %c0_18 = arith.constant 0 : index
    %23 = vector.load %arg8[%c0_17, %c0_18] : memref<8x8xf32, #tpu.memory_space<vmem>>, vector<8x8xf32>
    tpu.vector_store %arg8[%c0_17, %c0_18], %22 {strides = array<i32>} : memref<8x8xf32, #tpu.memory_space<vmem>>, vector<8x8xf32>,
    return
  }
  func.func @transform_0(%arg0: i32) -> (i32, i32) {
    %c0_i32 = arith.constant 0 : i32
    %c0_i32_0 = arith.constant 0 : i32
    return %arg0, %c0_i32 : i32, i32
  }
  func.func @transform_1(%arg0: i32) -> (i32, i32) {
    %c0_i32 = arith.constant 0 : i32
    %c0_i32_0 = arith.constant 0 : i32
    %c0_i32_1 = arith.constant 0 : i32
    return %c0_i32, %c0_i32_0 : i32, i32
  }
  func.func @transform_2(%arg0: i32) -> (i32, i32) {
    %c0_i32 = arith.constant 0 : i32
    %c0_i32_0 = arith.constant 0 : i32
    %c0_i32_1 = arith.constant 0 : i32
    return %c0_i32, %c0_i32_0 : i32, i32
  }
  func.func @transform_3(%arg0: i32) -> (i32, i32) {
    %c0_i32 = arith.constant 0 : i32
    %c0_i32_0 = arith.constant 0 : i32
    %c0_i32_1 = arith.constant 0 : i32
    return %c0_i32, %c0_i32_0 : i32, i32
  }
  func.func @transform_4(%arg0: i32) -> (i32, i32) {
    %c0_i32 = arith.constant 0 : i32
    %c0_i32_0 = arith.constant 0 : i32
    %c0_i32_1 = arith.constant 0 : i32
    return %c0_i32, %c0_i32_0 : i32, i32
  }
  func.func @transform_5(%arg0: i32) -> (i32, i32) {
    %c0_i32 = arith.constant 0 : i32
    %c0_i32_0 = arith.constant 0 : i32
    %c0_i32_1 = arith.constant 0 : i32
    return %c0_i32, %c0_i32_0 : i32, i32
  }
  func.func @transform_6(%arg0: i32) -> (i32, i32) {
    %c0_i32 = arith.constant 0 : i32
    %c0_i32_0 = arith.constant 0 : i32
    %c0_i32_1 = arith.constant 0 : i32
    return %c0_i32, %c0_i32_0 : i32, i32
  }
  func.func @transform_7(%arg0: i32) -> (i32, i32) {
    %c0_i32 = arith.constant 0 : i32
    %c0_i32_0 = arith.constant 0 : i32
    return %arg0, %c0_i32 : i32, i32
  }
}

</mosaic_0001>

<llo_original>
// kernel: tpu_custom_call.1
$region0: #{tpu_custom_call.1}
  #allocation0 [shape = 'u32[]', space=smem, size = 0x4, offset = 0x4, fixed_abs, tag = 'smem constant byte address 0x4 - core index']
  #allocation1 [shape = 'u32[144,128]{1,0:T(1,128)}', space=vmem, size = 0x12000, scoped, tag = 'internal scratch']
  %s0 = inlined_call_operand.vmem [shape: f32[8,1024], index: 0, kind: input, shape index: {}]
  %s1 = inlined_call_operand.hbm [shape: bf16[1024,128], index: 1, kind: input, shape index: {}]
  %s2 = inlined_call_operand.vmem [shape: f32[1,128], index: 2, kind: input, shape index: {}]
  %s3 = inlined_call_operand.hbm [shape: bf16[128,128], index: 3, kind: input, shape index: {}]
  %s4 = inlined_call_operand.vmem [shape: f32[1,128], index: 4, kind: input, shape index: {}]
  %s5 = inlined_call_operand.vmem [shape: bf16[128,8], index: 5, kind: input, shape index: {}]
  %s6 = inlined_call_operand.vmem [shape: f32[1,8], index: 6, kind: input, shape index: {}]
  %s7 = inlined_call_operand.hbm [shape: f32[8,8], index: 7, kind: output, shape index: {}]
  %s8 = sld [smem:[#allocation0]]
  $region46: #{tpu_custom_call.1} parent=0
    _
  %s10 = ssub.s32 1, %s8
  %s11 = scalar_select 0, %s10, %s8
  $region1: #{tpu_custom_call.1} parent=0
    #allocation2 [shape = 'u8[262144]{0}', space=vmem, size = 0x40000, scoped, tag = 'input window, operand 1, single buffered']
    #allocation3 [shape = 's32[1]{0}', space=sflag, size = 0x4, scoped, tag = 'scoped memory for tpu_custom_call.1']
    #allocation4 [shape = 's32[1]{0}', space=sflag, size = 0x4, scoped, tag = 'scoped memory for tpu_custom_call.1']
    #allocation5 [shape = 'u8[32768]{0}', space=vmem, size = 0x8000, scoped, tag = 'input window, operand 3, single buffered']
    #allocation6 [shape = 's32[1]{0}', space=sflag, size = 0x4, scoped, tag = 'scoped memory for tpu_custom_call.1']
    #allocation7 [shape = 'u8[4096]{0}', space=vmem, size = 0x1000, scoped, tag = 'output window, operand 0, single buffered']
    %12 = vsyncpa [#allocation3], 0
    %13 = vsyncpa [#allocation6], 0
    %14 = vsyncpa [#allocation4], 0
    // Predicated region
    $region2: #{tpu_custom_call.1} parent=1 // pred_check
      _
    $region3: #{tpu_custom_call.1} parent=1 // pred_check_branch
      %16 = sbr.rel (0) target = $region5
    $region4: #{tpu_custom_call.1} parent=1 // pred_region
      _
    $region5: #{tpu_custom_call.1} parent=1 // pred_fallthru
      _
    // Predicated region
    $region6: #{tpu_custom_call.1} parent=1 // pred_check
      _
    $region7: #{tpu_custom_call.1} parent=1 // pred_check_branch
      %18 = sbr.rel (0) target = $region9
    $region8: #{tpu_custom_call.1} parent=1 // pred_region
      %s20 = ssub.s32 8192, 8192
      %21 = vsyncadd [#allocation3], %s20
      %s22 = sshll.u32 [#allocation2], 4
      %s23 = int_to_ptr.vmem [resolvable:$true] %s22
      %28 = dma.hbm_to_vmem [thread:$0]  %s1, 8192, %s23, [#allocation3], 64, 64, 4
    $region9: #{tpu_custom_call.1} parent=1 // pred_fallthru
      _
    // Predicated region
    $region10: #{tpu_custom_call.1} parent=1 // pred_check
      _
    $region11: #{tpu_custom_call.1} parent=1 // pred_check_branch
      %30 = sbr.rel (0) target = $region13
    $region12: #{tpu_custom_call.1} parent=1 // pred_region
      _
    $region13: #{tpu_custom_call.1} parent=1 // pred_fallthru
      _
    // Predicated region
    $region14: #{tpu_custom_call.1} parent=1 // pred_check
      _
    $region15: #{tpu_custom_call.1} parent=1 // pred_check_branch
      %32 = sbr.rel (0) target = $region17
    $region16: #{tpu_custom_call.1} parent=1 // pred_region
      %s34 = ssub.s32 1024, 1024
      %35 = vsyncadd [#allocation6], %s34
      %s36 = sshll.u32 [#allocation5], 4
      %s37 = int_to_ptr.vmem [resolvable:$true] %s36
      %42 = dma.hbm_to_vmem [thread:$0]  %s3, 1024, %s37, [#allocation6], 64, 64, 4
    $region17: #{tpu_custom_call.1} parent=1 // pred_fallthru
      _
    // Predicated region
    $region18: #{tpu_custom_call.1} parent=1 // pred_check
      _
    $region19: #{tpu_custom_call.1} parent=1 // pred_check_branch
      %44 = sbr.rel (0) target = $region21
    $region20: #{tpu_custom_call.1} parent=1 // pred_region
      _
    $region21: #{tpu_custom_call.1} parent=1 // pred_fallthru
      _
    // Predicated region
    $region22: #{tpu_custom_call.1} parent=1 // pred_check
      _
    $region23: #{tpu_custom_call.1} parent=1 // pred_check_branch
      %46 = sbr.rel (0) target = $region25
    $region24: #{tpu_custom_call.1} parent=1 // pred_region
      _
    $region25: #{tpu_custom_call.1} parent=1 // pred_fallthru
      _
    // Predicated region
    $region26: #{tpu_custom_call.1} parent=1 // pred_check
      _
    $region27: #{tpu_custom_call.1} parent=1 // pred_check_branch
      %48 = sbr.rel (0) target = $region29
    $region28: #{tpu_custom_call.1} parent=1 // pred_region
      _
    $region29: #{tpu_custom_call.1} parent=1 // pred_fallthru
      _
    // Predicated region
    $region30: #{tpu_custom_call.1} parent=1 // pred_check
      _
    $region31: #{tpu_custom_call.1} parent=1 // pred_check_branch
      %50 = sbr.rel (0) target = $region33
    $region32: #{tpu_custom_call.1} parent=1 // pred_region
      %51 = dma.done [#allocation3], 8192
    $region33: #{tpu_custom_call.1} parent=1 // pred_fallthru
      _
    // Predicated region
    $region34: #{tpu_custom_call.1} parent=1 // pred_check
      _
    $region35: #{tpu_custom_call.1} parent=1 // pred_check_branch
      %53 = sbr.rel (0) target = $region37
    $region36: #{tpu_custom_call.1} parent=1 // pred_region
      %54 = dma.done [#allocation6], 1024
    $region37: #{tpu_custom_call.1} parent=1 // pred_fallthru
      _
    %v56 = vld [vmem:[%s0] sm:$0xff]
    %v57 = vld [vmem:[%s0 + $0x8] sm:$0xff]
    %v58 = vld [vmem:[%s0 + $0x10] sm:$0xff]
    %v59 = vld [vmem:[%s0 + $0x18] sm:$0xff]
    %v60 = vld [vmem:[%s0 + $0x20] sm:$0xff]
    %v61 = vld [vmem:[%s0 + $0x28] sm:$0xff]
    %v62 = vld [vmem:[%s0 + $0x30] sm:$0xff]
    %v63 = vld [vmem:[%s0 + $0x38] sm:$0xff]
    %v64 = vpack.c.bf16 %v56, %v56
    %v65 = vpack.c.bf16 %v57, %v57
    %v66 = vpack.c.bf16 %v58, %v58
    %v67 = vpack.c.bf16 %v59, %v59
    %v68 = vpack.c.bf16 %v60, %v60
    %v69 = vpack.c.bf16 %v61, %v61
    %v70 = vpack.c.bf16 %v62, %v62
    %v71 = vpack.c.bf16 %v63, %v63
    %v72 = vld [vmem:[#allocation2] sm:$0xf]
    %v73 = vld [vmem:[#allocation2 + $0x4] sm:$0xf]
    %v74 = vld [vmem:[#allocation2 + $0x8] sm:$0xf]
    %v75 = vld [vmem:[#allocation2 + $0xc] sm:$0xf]
    %v76 = vld [vmem:[#allocation2 + $0x10] sm:$0xf]
    %v77 = vld [vmem:[#allocation2 + $0x14] sm:$0xf]
    %v78 = vld [vmem:[#allocation2 + $0x18] sm:$0xf]
    %v79 = vld [vmem:[#allocation2 + $0x1c] sm:$0xf]
    %v80 = vld [vmem:[#allocation2 + $0x20] sm:$0xf]
    %v81 = vld [vmem:[#allocation2 + $0x24] sm:$0xf]
    %v82 = vld [vmem:[#allocation2 + $0x28] sm:$0xf]
    %v83 = vld [vmem:[#allocation2 + $0x2c] sm:$0xf]
    %v84 = vld [vmem:[#allocation2 + $0x30] sm:$0xf]
    %v85 = vld [vmem:[#allocation2 + $0x34] sm:$0xf]
    %v86 = vld [vmem:[#allocation2 + $0x38] sm:$0xf]
    %v87 = vld [vmem:[#allocation2 + $0x3c] sm:$0xf]
    %v88 = vld [vmem:[#allocation2 + $0x40] sm:$0xf]
    %v89 = vld [vmem:[#allocation2 + $0x44] sm:$0xf]
    %v90 = vld [vmem:[#allocation2 + $0x48] sm:$0xf]
    %v91 = vld [vmem:[#allocation2 + $0x4c] sm:$0xf]
    %v92 = vld [vmem:[#allocation2 + $0x50] sm:$0xf]
    %v93 = vld [vmem:[#allocation2 + $0x54] sm:$0xf]
    %v94 = vld [vmem:[#allocation2 + $0x58] sm:$0xf]
    %v95 = vld [vmem:[#allocation2 + $0x5c] sm:$0xf]
    %v96 = vld [vmem:[#allocation2 + $0x60] sm:$0xf]
    %v97 = vld [vmem:[#allocation2 + $0x64] sm:$0xf]
    %v98 = vld [vmem:[#allocation2 + $0x68] sm:$0xf]
    %v99 = vld [vmem:[#allocation2 + $0x6c] sm:$0xf]
    %v100 = vld [vmem:[#allocation2 + $0x70] sm:$0xf]
    %v101 = vld [vmem:[#allocation2 + $0x74] sm:$0xf]
    %v102 = vld [vmem:[#allocation2 + $0x78] sm:$0xf]
    %v103 = vld [vmem:[#allocation2 + $0x7c] sm:$0xf]
    %v104 = vld [vmem:[#allocation2 + $0x80] sm:$0xf]
    %v105 = vld [vmem:[#allocation2 + $0x84] sm:$0xf]
    %v106 = vld [vmem:[#allocation2 + $0x88] sm:$0xf]
    %v107 = vld [vmem:[#allocation2 + $0x8c] sm:$0xf]
    %v108 = vld [vmem:[#allocation2 + $0x90] sm:$0xf]
    %v109 = vld [vmem:[#allocation2 + $0x94] sm:$0xf]
    %v110 = vld [vmem:[#allocation2 + $0x98] sm:$0xf]
    %v111 = vld [vmem:[#allocation2 + $0x9c] sm:$0xf]
    %v112 = vld [vmem:[#allocation2 + $0xa0] sm:$0xf]
    %v113 = vld [vmem:[#allocation2 + $0xa4] sm:$0xf]
    %v114 = vld [vmem:[#allocation2 + $0xa8] sm:$0xf]
    %v115 = vld [vmem:[#allocation2 + $0xac] sm:$0xf]
    %v116 = vld [vmem:[#allocation2 + $0xb0] sm:$0xf]
    %v117 = vld [vmem:[#allocation2 + $0xb4] sm:$0xf]
    %v118 = vld [vmem:[#allocation2 + $0xb8] sm:$0xf]
    %v119 = vld [vmem:[#allocation2 + $0xbc] sm:$0xf]
    %v120 = vld [vmem:[#allocation2 + $0xc0] sm:$0xf]
    %v121 = vld [vmem:[#allocation2 + $0xc4] sm:$0xf]
    %v122 = vld [vmem:[#allocation2 + $0xc8] sm:$0xf]
    %v123 = vld [vmem:[#allocation2 + $0xcc] sm:$0xf]
    %v124 = vld [vmem:[#allocation2 + $0xd0] sm:$0xf]
    %v125 = vld [vmem:[#allocation2 + $0xd4] sm:$0xf]
    %v126 = vld [vmem:[#allocation2 + $0xd8] sm:$0xf]
    %v127 = vld [vmem:[#allocation2 + $0xdc] sm:$0xf]
    %v128 = vld [vmem:[#allocation2 + $0xe0] sm:$0xf]
    %v129 = vld [vmem:[#allocation2 + $0xe4] sm:$0xf]
    %v130 = vld [vmem:[#allocation2 + $0xe8] sm:$0xf]
    %v131 = vld [vmem:[#allocation2 + $0xec] sm:$0xf]
    %v132 = vld [vmem:[#allocation2 + $0xf0] sm:$0xf]
    %v133 = vld [vmem:[#allocation2 + $0xf4] sm:$0xf]
    %v134 = vld [vmem:[#allocation2 + $0xf8] sm:$0xf]
    %v135 = vld [vmem:[#allocation2 + $0xfc] sm:$0xf]
    %v136 = vld [vmem:[#allocation2 + $0x100] sm:$0xf]
    %v137 = vld [vmem:[#allocation2 + $0x104] sm:$0xf]
    %v138 = vld [vmem:[#allocation2 + $0x108] sm:$0xf]
    %v139 = vld [vmem:[#allocation2 + $0x10c] sm:$0xf]
    %v140 = vld [vmem:[#allocation2 + $0x110] sm:$0xf]
    %v141 = vld [vmem:[#allocation2 + $0x114] sm:$0xf]
    %v142 = vld [vmem:[#allocation2 + $0x118] sm:$0xf]
    %v143 = vld [vmem:[#allocation2 + $0x11c] sm:$0xf]
    %v144 = vld [vmem:[#allocation2 + $0x120] sm:$0xf]
    %v145 = vld [vmem:[#allocation2 + $0x124] sm:$0xf]
    %v146 = vld [vmem:[#allocation2 + $0x128] sm:$0xf]
    %v147 = vld [vmem:[#allocation2 + $0x12c] sm:$0xf]
    %v148 = vld [vmem:[#allocation2 + $0x130] sm:$0xf]
    %v149 = vld [vmem:[#allocation2 + $0x134] sm:$0xf]
    %v150 = vld [vmem:[#allocation2 + $0x138] sm:$0xf]
    %v151 = vld [vmem:[#allocation2 + $0x13c] sm:$0xf]
    %v152 = vld [vmem:[#allocation2 + $0x140] sm:$0xf]
    %v153 = vld [vmem:[#allocation2 + $0x144] sm:$0xf]
    %v154 = vld [vmem:[#allocation2 + $0x148] sm:$0xf]
    %v155 = vld [vmem:[#allocation2 + $0x14c] sm:$0xf]
    %v156 = vld [vmem:[#allocation2 + $0x150] sm:$0xf]
    %v157 = vld [vmem:[#allocation2 + $0x154] sm:$0xf]
    %v158 = vld [vmem:[#allocation2 + $0x158] sm:$0xf]
    %v159 = vld [vmem:[#allocation2 + $0x15c] sm:$0xf]
    %v160 = vld [vmem:[#allocation2 + $0x160] sm:$0xf]
    %v161 = vld [vmem:[#allocation2 + $0x164] sm:$0xf]
    %v162 = vld [vmem:[#allocation2 + $0x168] sm:$0xf]
    %v163 = vld [vmem:[#allocation2 + $0x16c] sm:$0xf]
    %v164 = vld [vmem:[#allocation2 + $0x170] sm:$0xf]
    %v165 = vld [vmem:[#allocation2 + $0x174] sm:$0xf]
    %v166 = vld [vmem:[#allocation2 + $0x178] sm:$0xf]
    %v167 = vld [vmem:[#allocation2 + $0x17c] sm:$0xf]
    %v168 = vld [vmem:[#allocation2 + $0x180] sm:$0xf]
    %v169 = vld [vmem:[#allocation2 + $0x184] sm:$0xf]
    %v170 = vld [vmem:[#allocation2 + $0x188] sm:$0xf]
    %v171 = vld [vmem:[#allocation2 + $0x18c] sm:$0xf]
    %v172 = vld [vmem:[#allocation2 + $0x190] sm:$0xf]
    %v173 = vld [vmem:[#allocation2 + $0x194] sm:$0xf]
    %v174 = vld [vmem:[#allocation2 + $0x198] sm:$0xf]
    %v175 = vld [vmem:[#allocation2 + $0x19c] sm:$0xf]
    %v176 = vld [vmem:[#allocation2 + $0x1a0] sm:$0xf]
    %v177 = vld [vmem:[#allocation2 + $0x1a4] sm:$0xf]
    %v178 = vld [vmem:[#allocation2 + $0x1a8] sm:$0xf]
    %v179 = vld [vmem:[#allocation2 + $0x1ac] sm:$0xf]
    %v180 = vld [vmem:[#allocation2 + $0x1b0] sm:$0xf]
    %v181 = vld [vmem:[#allocation2 + $0x1b4] sm:$0xf]
    %v182 = vld [vmem:[#allocation2 + $0x1b8] sm:$0xf]
    %v183 = vld [vmem:[#allocation2 + $0x1bc] sm:$0xf]
    %v184 = vld [vmem:[#allocation2 + $0x1c0] sm:$0xf]
    %v185 = vld [vmem:[#allocation2 + $0x1c4] sm:$0xf]
    %v186 = vld [vmem:[#allocation2 + $0x1c8] sm:$0xf]
    %v187 = vld [vmem:[#allocation2 + $0x1cc] sm:$0xf]
    %v188 = vld [vmem:[#allocation2 + $0x1d0] sm:$0xf]
    %v189 = vld [vmem:[#allocation2 + $0x1d4] sm:$0xf]
    %v190 = vld [vmem:[#allocation2 + $0x1d8] sm:$0xf]
    %v191 = vld [vmem:[#allocation2 + $0x1dc] sm:$0xf]
    %v192 = vld [vmem:[#allocation2 + $0x1e0] sm:$0xf]
    %v193 = vld [vmem:[#allocation2 + $0x1e4] sm:$0xf]
    %v194 = vld [vmem:[#allocation2 + $0x1e8] sm:$0xf]
    %v195 = vld [vmem:[#allocation2 + $0x1ec] sm:$0xf]
    %v196 = vld [vmem:[#allocation2 + $0x1f0] sm:$0xf]
    %v197 = vld [vmem:[#allocation2 + $0x1f4] sm:$0xf]
    %v198 = vld [vmem:[#allocation2 + $0x1f8] sm:$0xf]
    %v199 = vld [vmem:[#allocation2 + $0x1fc] sm:$0xf]
    %v200 = vld [vmem:[%s2] sm:$0x1]
    %v202 = vlaneseq
    %v203 = vshrl.u32 %v202, 7
    %v204 = vsub.s32 0, %v203
    %v205 = vrot.slane %v200, %v204
    %v335 = vunpack.c.l.b16 %v72
    %v336 = vunpack.c.l.b16 %v73
    %v337 = vunpack.c.l.b16 %v74
    %v338 = vunpack.c.l.b16 %v75
    %v339 = vunpack.c.l.b16 %v76
    %v340 = vunpack.c.l.b16 %v77
    %v341 = vunpack.c.l.b16 %v78
    %v342 = vunpack.c.l.b16 %v79
    %v343 = vunpack.c.l.b16 %v80
    %v344 = vunpack.c.l.b16 %v81
    %v345 = vunpack.c.l.b16 %v82
    %v346 = vunpack.c.l.b16 %v83
    %v347 = vunpack.c.l.b16 %v84
    %v348 = vunpack.c.l.b16 %v85
    %v349 = vunpack.c.l.b16 %v86
    %v350 = vunpack.c.l.b16 %v87
    %v351 = vunpack.c.l.b16 %v88
    %v352 = vunpack.c.l.b16 %v89
    %v353 = vunpack.c.l.b16 %v90
    %v354 = vunpack.c.l.b16 %v91
    %v355 = vunpack.c.l.b16 %v92
    %v356 = vunpack.c.l.b16 %v93
    %v357 = vunpack.c.l.b16 %v94
    %v358 = vunpack.c.l.b16 %v95
    %v359 = vunpack.c.l.b16 %v96
    %v360 = vunpack.c.l.b16 %v97
    %v361 = vunpack.c.l.b16 %v98
    %v362 = vunpack.c.l.b16 %v99
    %v363 = vunpack.c.l.b16 %v100
    %v364 = vunpack.c.l.b16 %v101
    %v365 = vunpack.c.l.b16 %v102
    %v366 = vunpack.c.l.b16 %v103
    %v367 = vunpack.c.l.b16 %v104
    %v368 = vunpack.c.l.b16 %v105
    %v369 = vunpack.c.l.b16 %v106
    %v370 = vunpack.c.l.b16 %v107
    %v371 = vunpack.c.l.b16 %v108
    %v372 = vunpack.c.l.b16 %v109
    %v373 = vunpack.c.l.b16 %v110
    %v374 = vunpack.c.l.b16 %v111
    %v375 = vunpack.c.l.b16 %v112
    %v376 = vunpack.c.l.b16 %v113
    %v377 = vunpack.c.l.b16 %v114
    %v378 = vunpack.c.l.b16 %v115
    %v379 = vunpack.c.l.b16 %v116
    %v380 = vunpack.c.l.b16 %v117
    %v381 = vunpack.c.l.b16 %v118
    %v382 = vunpack.c.l.b16 %v119
    %v383 = vunpack.c.l.b16 %v120
    %v384 = vunpack.c.l.b16 %v121
    %v385 = vunpack.c.l.b16 %v122
    %v386 = vunpack.c.l.b16 %v123
    %v387 = vunpack.c.l.b16 %v124
    %v388 = vunpack.c.l.b16 %v125
    %v389 = vunpack.c.l.b16 %v126
    %v390 = vunpack.c.l.b16 %v127
    %v391 = vunpack.c.l.b16 %v128
    %v392 = vunpack.c.l.b16 %v129
    %v393 = vunpack.c.l.b16 %v130
    %v394 = vunpack.c.l.b16 %v131
    %v395 = vunpack.c.l.b16 %v132
    %v396 = vunpack.c.l.b16 %v133
    %v397 = vunpack.c.l.b16 %v134
    %v398 = vunpack.c.l.b16 %v135
    %v399 = vunpack.c.l.b16 %v136
    %v400 = vunpack.c.l.b16 %v137
    %v401 = vunpack.c.l.b16 %v138
    %v402 = vunpack.c.l.b16 %v139
    %v403 = vunpack.c.l.b16 %v140
    %v404 = vunpack.c.l.b16 %v141
    %v405 = vunpack.c.l.b16 %v142
    %v406 = vunpack.c.l.b16 %v143
    %v407 = vunpack.c.l.b16 %v144
    %v408 = vunpack.c.l.b16 %v145
    %v409 = vunpack.c.l.b16 %v146
    %v410 = vunpack.c.l.b16 %v147
    %v411 = vunpack.c.l.b16 %v148
    %v412 = vunpack.c.l.b16 %v149
    %v413 = vunpack.c.l.b16 %v150
    %v414 = vunpack.c.l.b16 %v151
    %v415 = vunpack.c.l.b16 %v152
    %v416 = vunpack.c.l.b16 %v153
    %v417 = vunpack.c.l.b16 %v154
    %v418 = vunpack.c.l.b16 %v155
    %v419 = vunpack.c.l.b16 %v156
    %v420 = vunpack.c.l.b16 %v157
    %v421 = vunpack.c.l.b16 %v158
    %v422 = vunpack.c.l.b16 %v159
    %v423 = vunpack.c.l.b16 %v160
    %v424 = vunpack.c.l.b16 %v161
    %v425 = vunpack.c.l.b16 %v162
    %v426 = vunpack.c.l.b16 %v163
    %v427 = vunpack.c.l.b16 %v164
    %v428 = vunpack.c.l.b16 %v165
    %v429 = vunpack.c.l.b16 %v166
    %v430 = vunpack.c.l.b16 %v167
    %v431 = vunpack.c.l.b16 %v168
    %v432 = vunpack.c.l.b16 %v169
    %v433 = vunpack.c.l.b16 %v170
    %v434 = vunpack.c.l.b16 %v171
    %v435 = vunpack.c.l.b16 %v172
    %v436 = vunpack.c.l.b16 %v173
    %v437 = vunpack.c.l.b16 %v174
    %v438 = vunpack.c.l.b16 %v175
    %v439 = vunpack.c.l.b16 %v176
    %v440 = vunpack.c.l.b16 %v177
    %v441 = vunpack.c.l.b16 %v178
    %v442 = vunpack.c.l.b16 %v179
    %v443 = vunpack.c.l.b16 %v180
    %v444 = vunpack.c.l.b16 %v181
    %v445 = vunpack.c.l.b16 %v182
    %v446 = vunpack.c.l.b16 %v183
    %v447 = vunpack.c.l.b16 %v184
    %v448 = vunpack.c.l.b16 %v185
    %v449 = vunpack.c.l.b16 %v186
    %v450 = vunpack.c.l.b16 %v187
    %v451 = vunpack.c.l.b16 %v188
    %v452 = vunpack.c.l.b16 %v189
    %v453 = vunpack.c.l.b16 %v190
    %v454 = vunpack.c.l.b16 %v191
    %v455 = vunpack.c.l.b16 %v192
    %v456 = vunpack.c.l.b16 %v193
    %v457 = vunpack.c.l.b16 %v194
    %v458 = vunpack.c.l.b16 %v195
    %v459 = vunpack.c.l.b16 %v196
    %v460 = vunpack.c.l.b16 %v197
    %v461 = vunpack.c.l.b16 %v198
    %v462 = vunpack.c.l.b16 %v199
    %v463 = vpack.c.b16 %v336, %v335
    %v464 = vpack.c.b16 %v338, %v337
    %v465 = vpack.c.b16 %v340, %v339
    %v466 = vpack.c.b16 %v342, %v341
    %v467 = vpack.c.b16 %v344, %v343
    %v468 = vpack.c.b16 %v346, %v345
    %v469 = vpack.c.b16 %v348, %v347
    %v470 = vpack.c.b16 %v350, %v349
    %v471 = vpack.c.b16 %v352, %v351
    %v472 = vpack.c.b16 %v354, %v353
    %v473 = vpack.c.b16 %v356, %v355
    %v474 = vpack.c.b16 %v358, %v357
    %v475 = vpack.c.b16 %v360, %v359
    %v476 = vpack.c.b16 %v362, %v361
    %v477 = vpack.c.b16 %v364, %v363
    %v478 = vpack.c.b16 %v366, %v365
    %v479 = vpack.c.b16 %v368, %v367
    %v480 = vpack.c.b16 %v370, %v369
    %v481 = vpack.c.b16 %v372, %v371
    %v482 = vpack.c.b16 %v374, %v373
    %v483 = vpack.c.b16 %v376, %v375
    %v484 = vpack.c.b16 %v378, %v377
    %v485 = vpack.c.b16 %v380, %v379
    %v486 = vpack.c.b16 %v382, %v381
    %v487 = vpack.c.b16 %v384, %v383
    %v488 = vpack.c.b16 %v386, %v385
    %v489 = vpack.c.b16 %v388, %v387
    %v490 = vpack.c.b16 %v390, %v389
    %v491 = vpack.c.b16 %v392, %v391
    %v492 = vpack.c.b16 %v394, %v393
    %v493 = vpack.c.b16 %v396, %v395
    %v494 = vpack.c.b16 %v398, %v397
    %v495 = vpack.c.b16 %v400, %v399
    %v496 = vpack.c.b16 %v402, %v401
    %v497 = vpack.c.b16 %v404, %v403
    %v498 = vpack.c.b16 %v406, %v405
    %v499 = vpack.c.b16 %v408, %v407
    %v500 = vpack.c.b16 %v410, %v409
    %v501 = vpack.c.b16 %v412, %v411
    %v502 = vpack.c.b16 %v414, %v413
    %v503 = vpack.c.b16 %v416, %v415
    %v504 = vpack.c.b16 %v418, %v417
    %v505 = vpack.c.b16 %v420, %v419
    %v506 = vpack.c.b16 %v422, %v421
    %v507 = vpack.c.b16 %v424, %v423
    %v508 = vpack.c.b16 %v426, %v425
    %v509 = vpack.c.b16 %v428, %v427
    %v510 = vpack.c.b16 %v430, %v429
    %v511 = vpack.c.b16 %v432, %v431
    %v512 = vpack.c.b16 %v434, %v433
    %v513 = vpack.c.b16 %v436, %v435
    %v514 = vpack.c.b16 %v438, %v437
    %v515 = vpack.c.b16 %v440, %v439
    %v516 = vpack.c.b16 %v442, %v441
    %v517 = vpack.c.b16 %v444, %v443
    %v518 = vpack.c.b16 %v446, %v445
    %v519 = vpack.c.b16 %v448, %v447
    %v520 = vpack.c.b16 %v450, %v449
    %v521 = vpack.c.b16 %v452, %v451
    %v522 = vpack.c.b16 %v454, %v453
    %v523 = vpack.c.b16 %v456, %v455
    %v524 = vpack.c.b16 %v458, %v457
    %v525 = vpack.c.b16 %v460, %v459
    %v526 = vpack.c.b16 %v462, %v461
    %591 = vmatprep.subr.bf16.mxu0 0
    %592 = vmatpush1.bf16.msra.mxu0 %v470
    %593 = vmatprep.subr.bf16.mxu0 0
    %594 = vmatpush1.bf16.msra.mxu0 %v469
    %595 = vmatprep.subr.bf16.mxu0 0
    %596 = vmatpush1.bf16.msra.mxu0 %v468
    %597 = vmatprep.subr.bf16.mxu0 0
    %598 = vmatpush1.bf16.msra.mxu0 %v467
    %599 = vmatprep.subr.bf16.mxu0 0
    %600 = vmatpush1.bf16.msra.mxu0 %v466
    %601 = vmatprep.subr.bf16.mxu0 0
    %602 = vmatpush1.bf16.msra.mxu0 %v465
    %603 = vmatprep.subr.bf16.mxu0 0
    %604 = vmatpush1.bf16.msra.mxu0 %v464
    %605 = vmatprep.subr.bf16.mxu0 0
    %606 = vmatpush1.bf16.msra.mxu0 %v463
    %607 = vmatprep.subr.bf16.mxu0 0
    %608 = vmatpush2.bf16.msra.mxu0 %v478
    %609 = vmatprep.subr.bf16.mxu0 0
    %610 = vmatpush2.bf16.msra.mxu0 %v477
    %611 = vmatprep.subr.bf16.mxu0 0
    %612 = vmatpush2.bf16.msra.mxu0 %v476
    %613 = vmatprep.subr.bf16.mxu0 0
    %614 = vmatpush2.bf16.msra.mxu0 %v475
    %615 = vmatprep.subr.bf16.mxu0 0
    %616 = vmatpush2.bf16.msra.mxu0 %v474
    %617 = vmatprep.subr.bf16.mxu0 0
    %618 = vmatpush2.bf16.msra.mxu0 %v473
    %619 = vmatprep.subr.bf16.mxu0 0
    %620 = vmatpush2.bf16.msra.mxu0 %v472
    %621 = vmatprep.subr.bf16.mxu0 0
    %622 = vmatpush2.bf16.msra.mxu0 %v471
    %623 = vmatprep.mubr.bf16.mxu0 %v65
    %624 = vmatmul.mubr.bf16.gmra.mxu0 %v64
    %v625 = vpop.f32.mrf.mxu0
    %v626 = vadd.f32 %v205, %v625
    %v627 = vpop.f32.mrf.mxu0
    %v628 = vpop.f32.mrf.mxu0
    %v629 = vpop.f32.mrf.mxu0
    %630 = vdwg.mxu0
    %631 = vmatprep.subr.bf16.mxu0 0
    %632 = vmatpush1.bf16.msra.mxu0 %v486
    %633 = vmatprep.subr.bf16.mxu0 0
    %634 = vmatpush1.bf16.msra.mxu0 %v485
    %635 = vmatprep.subr.bf16.mxu0 0
    %636 = vmatpush1.bf16.msra.mxu0 %v484
    %637 = vmatprep.subr.bf16.mxu0 0
    %638 = vmatpush1.bf16.msra.mxu0 %v483
    %639 = vmatprep.subr.bf16.mxu0 0
    %640 = vmatpush1.bf16.msra.mxu0 %v482
    %641 = vmatprep.subr.bf16.mxu0 0
    %642 = vmatpush1.bf16.msra.mxu0 %v481
    %643 = vmatprep.subr.bf16.mxu0 0
    %644 = vmatpush1.bf16.msra.mxu0 %v480
    %645 = vmatprep.subr.bf16.mxu0 0
    %646 = vmatpush1.bf16.msra.mxu0 %v479
    %647 = vmatprep.subr.bf16.mxu0 0
    %648 = vmatpush2.bf16.msra.mxu0 %v494
    %649 = vmatprep.subr.bf16.mxu0 0
    %650 = vmatpush2.bf16.msra.mxu0 %v493
    %651 = vmatprep.subr.bf16.mxu0 0
    %652 = vmatpush2.bf16.msra.mxu0 %v492
    %653 = vmatprep.subr.bf16.mxu0 0
    %654 = vmatpush2.bf16.msra.mxu0 %v491
    %655 = vmatprep.subr.bf16.mxu0 0
    %656 = vmatpush2.bf16.msra.mxu0 %v490
    %657 = vmatprep.subr.bf16.mxu0 0
    %658 = vmatpush2.bf16.msra.mxu0 %v489
    %659 = vmatprep.subr.bf16.mxu0 0
    %660 = vmatpush2.bf16.msra.mxu0 %v488
    %661 = vmatprep.subr.bf16.mxu0 0
    %662 = vmatpush2.bf16.msra.mxu0 %v487
    %663 = vmatprep.mubr.bf16.mxu0 %v67
    %664 = vmatmul.mubr.bf16.gmra.mxu0 %v66
    %v665 = vpop.f32.mrf.mxu0
    %v666 = vadd.f32 %v626, %v665
    %v667 = vpop.f32.mrf.mxu0
    %v668 = vpop.f32.mrf.mxu0
    %v669 = vpop.f32.mrf.mxu0
    %670 = vdwg.mxu0
    %671 = vmatprep.subr.bf16.mxu0 0
    %672 = vmatpush1.bf16.msra.mxu0 %v502
    %673 = vmatprep.subr.bf16.mxu0 0
    %674 = vmatpush1.bf16.msra.mxu0 %v501
    %675 = vmatprep.subr.bf16.mxu0 0
    %676 = vmatpush1.bf16.msra.mxu0 %v500
    %677 = vmatprep.subr.bf16.mxu0 0
    %678 = vmatpush1.bf16.msra.mxu0 %v499
    %679 = vmatprep.subr.bf16.mxu0 0
    %680 = vmatpush1.bf16.msra.mxu0 %v498
    %681 = vmatprep.subr.bf16.mxu0 0
    %682 = vmatpush1.bf16.msra.mxu0 %v497
    %683 = vmatprep.subr.bf16.mxu0 0
    %684 = vmatpush1.bf16.msra.mxu0 %v496
    %685 = vmatprep.subr.bf16.mxu0 0
    %686 = vmatpush1.bf16.msra.mxu0 %v495
    %687 = vmatprep.subr.bf16.mxu0 0
    %688 = vmatpush2.bf16.msra.mxu0 %v510
    %689 = vmatprep.subr.bf16.mxu0 0
    %690 = vmatpush2.bf16.msra.mxu0 %v509
    %691 = vmatprep.subr.bf16.mxu0 0
    %692 = vmatpush2.bf16.msra.mxu0 %v508
    %693 = vmatprep.subr.bf16.mxu0 0
    %694 = vmatpush2.bf16.msra.mxu0 %v507
    %695 = vmatprep.subr.bf16.mxu0 0
    %696 = vmatpush2.bf16.msra.mxu0 %v506
    %697 = vmatprep.subr.bf16.mxu0 0
    %698 = vmatpush2.bf16.msra.mxu0 %v505
    %699 = vmatprep.subr.bf16.mxu0 0
    %700 = vmatpush2.bf16.msra.mxu0 %v504
    %701 = vmatprep.subr.bf16.mxu0 0
    %702 = vmatpush2.bf16.msra.mxu0 %v503
    %703 = vmatprep.mubr.bf16.mxu0 %v69
    %704 = vmatmul.mubr.bf16.gmra.mxu0 %v68
    %v705 = vpop.f32.mrf.mxu0
    %v706 = vadd.f32 %v666, %v705
    %v707 = vpop.f32.mrf.mxu0
    %v708 = vpop.f32.mrf.mxu0
    %v709 = vpop.f32.mrf.mxu0
    %710 = vdwg.mxu0
    %711 = vmatprep.subr.bf16.mxu0 0
    %712 = vmatpush1.bf16.msra.mxu0 %v518
    %713 = vmatprep.subr.bf16.mxu0 0
    %714 = vmatpush1.bf16.msra.mxu0 %v517
    %715 = vmatprep.subr.bf16.mxu0 0
    %716 = vmatpush1.bf16.msra.mxu0 %v516
    %717 = vmatprep.subr.bf16.mxu0 0
    %718 = vmatpush1.bf16.msra.mxu0 %v515
    %719 = vmatprep.subr.bf16.mxu0 0
    %720 = vmatpush1.bf16.msra.mxu0 %v514
    %721 = vmatprep.subr.bf16.mxu0 0
    %722 = vmatpush1.bf16.msra.mxu0 %v513
    %723 = vmatprep.subr.bf16.mxu0 0
    %724 = vmatpush1.bf16.msra.mxu0 %v512
    %725 = vmatprep.subr.bf16.mxu0 0
    %726 = vmatpush1.bf16.msra.mxu0 %v511
    %727 = vmatprep.subr.bf16.mxu0 0
    %728 = vmatpush2.bf16.msra.mxu0 %v526
    %729 = vmatprep.subr.bf16.mxu0 0
    %730 = vmatpush2.bf16.msra.mxu0 %v525
    %731 = vmatprep.subr.bf16.mxu0 0
    %732 = vmatpush2.bf16.msra.mxu0 %v524
    %733 = vmatprep.subr.bf16.mxu0 0
    %734 = vmatpush2.bf16.msra.mxu0 %v523
    %735 = vmatprep.subr.bf16.mxu0 0
    %736 = vmatpush2.bf16.msra.mxu0 %v522
    %737 = vmatprep.subr.bf16.mxu0 0
    %738 = vmatpush2.bf16.msra.mxu0 %v521
    %739 = vmatprep.subr.bf16.mxu0 0
    %740 = vmatpush2.bf16.msra.mxu0 %v520
    %741 = vmatprep.subr.bf16.mxu0 0
    %742 = vmatpush2.bf16.msra.mxu0 %v519
    %743 = vmatprep.mubr.bf16.mxu0 %v71
    %744 = vmatmul.mubr.bf16.gmra.mxu0 %v70
    %v745 = vpop.f32.mrf.mxu0
    %v746 = vadd.f32 %v706, %v745
    %v747 = vpop.f32.mrf.mxu0
    %v748 = vpop.f32.mrf.mxu0
    %v749 = vpop.f32.mrf.mxu0
    %750 = vdwg.mxu0
    %v751 = vmax.f32 %v746, 0.0
    %v752 = vpack.c.bf16 %v751, %v751
    %v753 = vld [vmem:[#allocation5] sm:$0xf]
    %v754 = vld [vmem:[#allocation5 + $0x4] sm:$0xf]
    %v755 = vld [vmem:[#allocation5 + $0x8] sm:$0xf]
    %v756 = vld [vmem:[#allocation5 + $0xc] sm:$0xf]
    %v757 = vld [vmem:[#allocation5 + $0x10] sm:$0xf]
    %v758 = vld [vmem:[#allocation5 + $0x14] sm:$0xf]
    %v759 = vld [vmem:[#allocation5 + $0x18] sm:$0xf]
    %v760 = vld [vmem:[#allocation5 + $0x1c] sm:$0xf]
    %v761 = vld [vmem:[#allocation5 + $0x20] sm:$0xf]
    %v762 = vld [vmem:[#allocation5 + $0x24] sm:$0xf]
    %v763 = vld [vmem:[#allocation5 + $0x28] sm:$0xf]
    %v764 = vld [vmem:[#allocation5 + $0x2c] sm:$0xf]
    %v765 = vld [vmem:[#allocation5 + $0x30] sm:$0xf]
    %v766 = vld [vmem:[#allocation5 + $0x34] sm:$0xf]
    %v767 = vld [vmem:[#allocation5 + $0x38] sm:$0xf]
    %v768 = vld [vmem:[#allocation5 + $0x3c] sm:$0xf]
    %v769 = vld [vmem:[%s4] sm:$0x1]
    %v771 = vlaneseq
    %v772 = vshrl.u32 %v771, 7
    %v773 = vsub.s32 0, %v772
    %v774 = vrot.slane %v769, %v773
    %v792 = vunpack.c.l.b16 %v753
    %v793 = vunpack.c.l.b16 %v754
    %v794 = vunpack.c.l.b16 %v755
    %v795 = vunpack.c.l.b16 %v756
    %v796 = vunpack.c.l.b16 %v757
    %v797 = vunpack.c.l.b16 %v758
    %v798 = vunpack.c.l.b16 %v759
    %v799 = vunpack.c.l.b16 %v760
    %v800 = vunpack.c.l.b16 %v761
    %v801 = vunpack.c.l.b16 %v762
    %v802 = vunpack.c.l.b16 %v763
    %v803 = vunpack.c.l.b16 %v764
    %v804 = vunpack.c.l.b16 %v765
    %v805 = vunpack.c.l.b16 %v766
    %v806 = vunpack.c.l.b16 %v767
    %v807 = vunpack.c.l.b16 %v768
    %v808 = vpack.c.b16 %v793, %v792
    %v809 = vpack.c.b16 %v795, %v794
    %v810 = vpack.c.b16 %v797, %v796
    %v811 = vpack.c.b16 %v799, %v798
    %v812 = vpack.c.b16 %v801, %v800
    %v813 = vpack.c.b16 %v803, %v802
    %v814 = vpack.c.b16 %v805, %v804
    %v815 = vpack.c.b16 %v807, %v806
    %824 = vmatprep.subr.bf16.mxu0 0
    %825 = vmatpush1.bf16.msra.mxu0 %v815
    %826 = vmatprep.subr.bf16.mxu0 0
    %827 = vmatpush1.bf16.msra.mxu0 %v814
    %828 = vmatprep.subr.bf16.mxu0 0
    %829 = vmatpush1.bf16.msra.mxu0 %v813
    %830 = vmatprep.subr.bf16.mxu0 0
    %831 = vmatpush1.bf16.msra.mxu0 %v812
    %832 = vmatprep.subr.bf16.mxu0 0
    %833 = vmatpush1.bf16.msra.mxu0 %v811
    %834 = vmatprep.subr.bf16.mxu0 0
    %835 = vmatpush1.bf16.msra.mxu0 %v810
    %836 = vmatprep.subr.bf16.mxu0 0
    %837 = vmatpush1.bf16.msra.mxu0 %v809
    %838 = vmatprep.subr.bf16.mxu0 0
    %839 = vmatpush1.bf16.msra.mxu0 %v808
    %840 = vmatprep.subr.bf16.mxu0 0
    %841 = vmatpush2.bf16.msra.mxu0 0
    %842 = vmatprep.subr.bf16.mxu0 0
    %843 = vmatpush2.bf16.msra.mxu0 0
    %844 = vmatprep.subr.bf16.mxu0 0
    %845 = vmatpush2.bf16.msra.mxu0 0
    %846 = vmatprep.subr.bf16.mxu0 0
    %847 = vmatpush2.bf16.msra.mxu0 0
    %848 = vmatprep.subr.bf16.mxu0 0
    %849 = vmatpush2.bf16.msra.mxu0 0
    %850 = vmatprep.subr.bf16.mxu0 0
    %851 = vmatpush2.bf16.msra.mxu0 0
    %852 = vmatprep.subr.bf16.mxu0 0
    %853 = vmatpush2.bf16.msra.mxu0 0
    %854 = vmatprep.subr.bf16.mxu0 0
    %855 = vmatpush2.bf16.msra.mxu0 0
    %856 = vmatprep.mubr.bf16.mxu0 0
    %857 = vmatmul.mubr.bf16.gmra.mxu0 %v752
    %v858 = vpop.f32.mrf.mxu0
    %v859 = vadd.f32 %v774, %v858
    %v860 = vpop.f32.mrf.mxu0
    %v861 = vpop.f32.mrf.mxu0
    %v862 = vpop.f32.mrf.mxu0
    %863 = vdwg.mxu0
    %v864 = vmax.f32 %v859, 0.0
    %v865 = vpack.c.bf16 %v864, %v864
    %v866 = vld [vmem:[%s5] sm:$0xf]
    %v867 = vld [vmem:[%s5 + $0x4] sm:$0xf]
    %v868 = vld [vmem:[%s5 + $0x8] sm:$0xf]
    %v869 = vld [vmem:[%s5 + $0xc] sm:$0xf]
    %v870 = vld [vmem:[%s5 + $0x10] sm:$0xf]
    %v871 = vld [vmem:[%s5 + $0x14] sm:$0xf]
    %v872 = vld [vmem:[%s5 + $0x18] sm:$0xf]
    %v873 = vld [vmem:[%s5 + $0x1c] sm:$0xf]
    %v874 = vld [vmem:[%s5 + $0x20] sm:$0xf]
    %v875 = vld [vmem:[%s5 + $0x24] sm:$0xf]
    %v876 = vld [vmem:[%s5 + $0x28] sm:$0xf]
    %v877 = vld [vmem:[%s5 + $0x2c] sm:$0xf]
    %v878 = vld [vmem:[%s5 + $0x30] sm:$0xf]
    %v879 = vld [vmem:[%s5 + $0x34] sm:$0xf]
    %v880 = vld [vmem:[%s5 + $0x38] sm:$0xf]
    %v881 = vld [vmem:[%s5 + $0x3c] sm:$0xf]
    %v882 = vld [vmem:[%s6] sm:$0x1]
    %v884 = vlaneseq
    %v885 = vshrl.u32 %v884, 7
    %v886 = vsub.s32 0, %v885
    %v887 = vrot.slane %v882, %v886
    %v905 = vunpack.c.l.b16 %v866
    %v906 = vunpack.c.l.b16 %v867
    %v907 = vunpack.c.l.b16 %v868
    %v908 = vunpack.c.l.b16 %v869
    %v909 = vunpack.c.l.b16 %v870
    %v910 = vunpack.c.l.b16 %v871
    %v911 = vunpack.c.l.b16 %v872
    %v912 = vunpack.c.l.b16 %v873
    %v913 = vunpack.c.l.b16 %v874
    %v914 = vunpack.c.l.b16 %v875
    %v915 = vunpack.c.l.b16 %v876
    %v916 = vunpack.c.l.b16 %v877
    %v917 = vunpack.c.l.b16 %v878
    %v918 = vunpack.c.l.b16 %v879
    %v919 = vunpack.c.l.b16 %v880
    %v920 = vunpack.c.l.b16 %v881
    %v921 = vpack.c.b16 %v906, %v905
    %v922 = vpack.c.b16 %v908, %v907
    %v923 = vpack.c.b16 %v910, %v909
    %v924 = vpack.c.b16 %v912, %v911
    %v925 = vpack.c.b16 %v914, %v913
    %v926 = vpack.c.b16 %v916, %v915
    %v927 = vpack.c.b16 %v918, %v917
    %v928 = vpack.c.b16 %v920, %v919
    %937 = vmatprep.subr.bf16.mxu0 0
    %938 = vmatpush1.bf16.msra.mxu0 %v928
    %939 = vmatprep.subr.bf16.mxu0 0
    %940 = vmatpush1.bf16.msra.mxu0 %v927
    %941 = vmatprep.subr.bf16.mxu0 0
    %942 = vmatpush1.bf16.msra.mxu0 %v926
    %943 = vmatprep.subr.bf16.mxu0 0
    %944 = vmatpush1.bf16.msra.mxu0 %v925
    %945 = vmatprep.subr.bf16.mxu0 0
    %946 = vmatpush1.bf16.msra.mxu0 %v924
    %947 = vmatprep.subr.bf16.mxu0 0
    %948 = vmatpush1.bf16.msra.mxu0 %v923
    %949 = vmatprep.subr.bf16.mxu0 0
    %950 = vmatpush1.bf16.msra.mxu0 %v922
    %951 = vmatprep.subr.bf16.mxu0 0
    %952 = vmatpush1.bf16.msra.mxu0 %v921
    %953 = vmatprep.subr.bf16.mxu0 0
    %954 = vmatpush2.bf16.msra.mxu0 0
    %955 = vmatprep.subr.bf16.mxu0 0
    %956 = vmatpush2.bf16.msra.mxu0 0
    %957 = vmatprep.subr.bf16.mxu0 0
    %958 = vmatpush2.bf16.msra.mxu0 0
    %959 = vmatprep.subr.bf16.mxu0 0
    %960 = vmatpush2.bf16.msra.mxu0 0
    %961 = vmatprep.subr.bf16.mxu0 0
    %962 = vmatpush2.bf16.msra.mxu0 0
    %963 = vmatprep.subr.bf16.mxu0 0
    %964 = vmatpush2.bf16.msra.mxu0 0
    %965 = vmatprep.subr.bf16.mxu0 0
    %966 = vmatpush2.bf16.msra.mxu0 0
    %967 = vmatprep.subr.bf16.mxu0 0
    %968 = vmatpush2.bf16.msra.mxu0 0
    %969 = vmatprep.mubr.bf16.mxu0 0
    %970 = vmatmul.mubr.bf16.gmra.mxu0 %v865
    %v971 = vpop.f32.mrf.mxu0
    %v972 = vadd.f32 %v887, %v971
    %v973 = vpop.f32.mrf.mxu0
    %v974 = vpop.f32.mrf.mxu0
    %v975 = vpop.f32.mrf.mxu0
    %976 = vdwg.mxu0
    %vm977 = vcmask 64512
    %978 = vst.msk [vmem:[#allocation7] sm:$0xff] %vm977, %v972
    // Predicated region
    $region38: #{tpu_custom_call.1} parent=1 // pred_check
      _
    $region39: #{tpu_custom_call.1} parent=1 // pred_check_branch
      %980 = sbr.rel (0) target = $region41
    $region40: #{tpu_custom_call.1} parent=1 // pred_region
      %s982 = ssub.s32 128, 128
      %983 = vsyncadd [#allocation4], %s982
      %s985 = sshll.u32 [#allocation7], 4
      %s986 = int_to_ptr.vmem [resolvable:$true] %s985
      %988 = dma.vmem_to_hbm [thread:$0]  %s986, 128, %s7, [#allocation4]
    $region41: #{tpu_custom_call.1} parent=1 // pred_fallthru
      _
    // Predicated region
    $region42: #{tpu_custom_call.1} parent=1 // pred_check
      _
    $region43: #{tpu_custom_call.1} parent=1 // pred_check_branch
      %990 = sbr.rel (0) target = $region45
    $region44: #{tpu_custom_call.1} parent=1 // pred_region
      %991 = dma.done [#allocation4], 128
    $region45: #{tpu_custom_call.1} parent=1 // pred_fallthru
      _
    %992 = vsyncpa [#allocation3], 1
    %993 = vsyncpa [#allocation6], 1
    %994 = vsyncpa [#allocation4], 1

</llo_original>
